<compile_context>
chip_gen: v7x
topology: tpu7x:2x2x1
jax: 0.10.0
libtpu: 0.0.40
codegen_flags: <defaults>
</compile_context>

<pallas_src>
import functools

import jax
import jax.numpy as jnp
from jax import lax
from jax.experimental import pallas as pl
from jax.experimental.pallas import tpu as pltpu


def _round_up(x, m):
    return (x + m - 1) // m * m


def _pick_block(n, c, *, target_tile_bytes=4 << 20, working_set_cap=24 << 20):
    """Columns per grid step, sized from the VMEM budget (not a fixed 1024).

    Targets ~4 MiB of useful logits bytes per step (amortizes the ~0.35 us
    per-step pipeline overhead), capped so the double-buffered working set
    stays under ~24 MiB (comfortable under v7x's 64 MiB physical VMEM; v5e/v6e
    have more headroom).  VMEM sublane padding is accounted for: the class
    axis rounds up to 8 sublanes and the (1, block) i32 target tile occupies a
    full 8-sublane tile.
    """
    c_sub = _round_up(max(c, 1), 8)
    per_col_vmem = 4 * c_sub + 4 * 8          # logits tile + (1, block) i32 targets tile
    block_a = target_tile_bytes // (4 * c_sub)
    block_b = (working_set_cap // 2) // per_col_vmem
    block = max(128, (min(block_a, block_b) // 128) * 128)
    block = min(block, _round_up(n, 128))
    working_set = 2 * per_col_vmem * block
    return block, working_set


def _focal_loss_kernel(logits_ref, tgt_ref, alpha_ref, out_ref, *,
                       gamma: float, n: int, per_sample: bool):
    i = pl.program_id(0)
    logits = logits_ref[...]            # (C, BN) f32: classes on sublanes, batch on lanes
    tgt = tgt_ref[...]                  # (1, BN) i32
    alpha_col = alpha_ref[...]          # (C, 1) f32, VMEM-resident across the grid
    bn = logits.shape[1]

    # Valid-column mask: handles both the pad-to-128 tail and a ragged final
    # grid block (block need not divide the padded batch).  Use a select, not
    # multiply-by-zero, so inf/NaN from garbage tail columns cannot leak.
    col = i * bn + lax.broadcasted_iota(jnp.int32, (1, bn), 1)
    valid = col < n

    # log-softmax pieces along the class (sublane) axis; single exp pass.
    m = jnp.max(logits, axis=0, keepdims=True)                  # (1, BN)
    shifted = logits - m                                        # (C, BN)
    e = jnp.exp(shifted)                                        # (C, BN)  (EUP)
    sumexp = jnp.sum(e, axis=0, keepdims=True)                  # (1, BN)

    # gather(dim=class) via a one-hot sublane mask; alpha_t reuses the same mask.
    cls = lax.broadcasted_iota(jnp.int32, logits.shape, 0)
    onehot = cls == tgt                                         # (C, BN)
    shifted_t = jnp.sum(jnp.where(onehot, shifted, 0.0), axis=0, keepdims=True)
    e_t = jnp.sum(jnp.where(onehot, e, 0.0), axis=0, keepdims=True)
    alpha_t = jnp.sum(jnp.where(onehot, alpha_col, 0.0), axis=0, keepdims=True)

    log_pt = shifted_t - jnp.log(sumexp)                        # (1, BN)
    # Reuse e instead of a second exp(log_pt).
    # TODO(synk): flip to approx=True if large C ever makes this EUP-bound;
    #             the exact reciprocal keeps numerics tight vs. the reference.
    pt = e_t * pl.reciprocal(sumexp, approx=False)
    ce = -log_pt
    one_minus_pt = jnp.maximum(1.0 - pt, 0.0)   # clamp: pt can round slightly above 1
    if float(gamma) == float(int(gamma)) and gamma >= 0:
        # Integer gamma: plain VPU multiplies instead of exp(gamma*log(x)).
        modulator = lax.integer_pow(one_minus_pt, int(gamma))
    else:
        # x**g as exp(g*log(x)); log(0) -> -inf -> exp -> 0 handles pt == 1.
        modulator = jnp.exp(gamma * jnp.log(one_minus_pt))
    focal = jnp.where(valid, alpha_t * modulator * ce, 0.0)     # (1, BN)

    if per_sample:
        out_ref[...] = focal                                    # reduction='none'
    else:
        # Per-tile partial sum written to a lane-dense (1, 128) row (lane 0
        # carries the value).  No carried accumulator -> the grid axis is
        # truly "parallel" (shards across both v7x TensorCores).
        lane = lax.broadcasted_iota(jnp.int32, (1, 128), 1)
        out_ref[...] = jnp.where(lane == 0, jnp.sum(focal), 0.0)


def focal_loss(logits, targets, alpha=None, *, gamma=2.0, reduction="mean",
               class_major=False):
    """Matches the PyTorch FocalLoss forward.

    logits: (N, C) f32 (or (C, N) if class_major=True, which skips the wrapper
    transpose), targets: (N,) int, alpha: None | float | (C,) array.
    Returns a scalar for 'mean'/'sum', an (N,) vector for 'none'.
    """
    if class_major:
        c, n = logits.shape
        logits_cn = logits.astype(jnp.float32)
    else:
        n, c = logits.shape
        # TODO(synk): extra HBM round-trip; feed class-major activations or use
        #             allow_input_fusion when the producer layout permits.
        logits_cn = jnp.transpose(logits.astype(jnp.float32))

    # Replicate the module's alpha handling; the (C,) table stays VMEM-resident
    # in-kernel (no per-sample alpha_t stream, no wrapper gather).
    if alpha is None:
        alpha_arr = jnp.ones((c,), jnp.float32)
    elif isinstance(alpha, (float, int)):
        alpha_arr = jnp.array([1.0 - float(alpha), float(alpha)], jnp.float32)
    else:
        alpha_arr = jnp.asarray(alpha, jnp.float32)
    assert alpha_arr.shape == (c,), "alpha must have num_classes entries"
    alpha_col = alpha_arr.reshape(c, 1)

    tgt = targets.astype(jnp.int32)

    # Pad the batch only to a lane multiple (<=127 extra columns); the ragged
    # tail is masked in-kernel against the true n.
    npad = _round_up(n, 128)
    if npad != n:
        logits_cn = jnp.pad(logits_cn, ((0, 0), (0, npad - n)))
        tgt = jnp.pad(tgt, (0, npad - n))
    tgt2d = tgt.reshape(1, npad)

    block, working_set = _pick_block(n, c)
    grid_n = pl.cdiv(npad, block)
    # Explicit VMEM limit: v5e's scoped default is only 16 MiB; keep headroom
    # under v7x's 64 MiB physical.
    vmem_limit = max(int(working_set * 1.5) + (1 << 20), 16 << 20)
    vmem_limit = min(vmem_limit, 40 << 20)

    per_sample = reduction == "none"
    if per_sample:
        out_shape = jax.ShapeDtypeStruct((1, npad), jnp.float32)
        out_spec = pl.BlockSpec((1, block), lambda i: (0, i))
    else:
        if reduction not in ("mean", "sum"):
            raise ValueError("reduction must be 'mean', 'sum' or 'none'")
        out_shape = jax.ShapeDtypeStruct((1, grid_n * 128), jnp.float32)
        out_spec = pl.BlockSpec((1, 128), lambda i: (0, i))

    kernel = functools.partial(_focal_loss_kernel, gamma=float(gamma), n=n,
                               per_sample=per_sample)

    cost = pl.CostEstimate(
        flops=12 * n * c + 16 * n,
        transcendentals=n * (c + 2),
        bytes_accessed=4 * n * c + 4 * n + 4 * c + 4 * grid_n * 128,
    )

    out = pl.pallas_call(
        kernel,
        out_shape=out_shape,
        grid_spec=pltpu.PrefetchScalarGridSpec(
            num_scalar_prefetch=0,
            grid=(grid_n,),
            in_specs=[
                pl.BlockSpec((c, block), lambda i: (0, i)),   # logits (lane-dense tile)
                pl.BlockSpec((1, block), lambda i: (0, i)),   # targets
                pl.BlockSpec((c, 1), lambda i: (0, 0)),       # alpha table (resident)
            ],
            out_specs=out_spec,
        ),
        compiler_params=pltpu.CompilerParams(
            dimension_semantics=("parallel",),   # per-tile partials, no carry
            vmem_limit_bytes=vmem_limit,
        ),
        cost_estimate=cost,
    )(logits_cn, tgt2d, alpha_col)

    if per_sample:
        return out[0, :n]
    total = jnp.sum(out)
    return total / n if reduction == "mean" else total


def focal_loss_ref(logits, targets, alpha, gamma=2.0, reduction="mean"):
    """Pure-JAX reference matching the PyTorch module."""
    logp = jax.nn.log_softmax(logits, axis=1)
    log_pt = jnp.take_along_axis(logp, targets.reshape(-1, 1), axis=1)[:, 0]
    pt = jnp.exp(log_pt)
    ce = -log_pt
    mod = (1.0 - pt) ** gamma
    alpha_t = jnp.ones_like(pt) if alpha is None else alpha[targets]
    fl = alpha_t * mod * ce
    if reduction == "mean":
        return jnp.mean(fl)
    if reduction == "sum":
        return jnp.sum(fl)
    return fl


if __name__ == "__main__":
    key = jax.random.PRNGKey(0)
    N, C = 64, 8   # batch, num_classes
    k1, k2 = jax.random.split(key)
    logits = jax.random.normal(k1, (N, C), dtype=jnp.float32) * 2.0
    targets = jax.random.randint(k2, (N,), 0, C, dtype=jnp.int32)
    # Deterministic per-class alpha weights (as if passed as a list to __init__).
    alpha = jnp.linspace(0.25, 1.0, C, dtype=jnp.float32)

    loss = jax.block_until_ready(focal_loss(logits, targets, alpha, gamma=2.0))
    ref = focal_loss_ref(logits, targets, alpha, gamma=2.0)
    assert jnp.allclose(loss, ref, rtol=1e-5, atol=1e-5), (loss, ref)

    per_sample = jax.block_until_ready(
        focal_loss(logits, targets, alpha, gamma=2.0, reduction="none"))
    ref_ps = focal_loss_ref(logits, targets, alpha, gamma=2.0, reduction="none")
    assert per_sample.shape == (N,)
    assert jnp.allclose(per_sample, ref_ps, rtol=1e-5, atol=1e-5), (per_sample, ref_ps)

    print("KERNEL_OK")
</pallas_src>

<mosaic_0001>
module attributes {stable_mosaic.version = 11 : i64} {
  func.func @_focal_loss_kernel(%arg0: i32, %arg1: memref<8x128xf32, #tpu.memory_space<vmem>>, %arg2: memref<1x128xi32, #tpu.memory_space<vmem>>, %arg3: memref<8x1xf32, #tpu.memory_space<vmem>>, %arg4: memref<1x128xf32, #tpu.memory_space<vmem>>) attributes {dimension_semantics = [#tpu.dimension_semantics<parallel>], iteration_bounds = array<i64: 1>, scalar_prefetch = 0 : i64, scratch_operands = 0 : i64, tpu.core_type = #tpu.core_type<tc>, window_params = [{transform_indices = @transform_0, window_bounds = array<i64: 8, 128>}, {transform_indices = @transform_1, window_bounds = array<i64: 1, 128>}, {pipeline_mode = #tpu.pipeline_mode<synchronous>, transform_indices = @transform_2, window_bounds = array<i64: 8, 1>}, {transform_indices = @transform_3, window_bounds = array<i64: 1, 128>}]} {
    %c0 = arith.constant 0 : index
    %c0_0 = arith.constant 0 : index
    %0 = vector.load %arg1[%c0, %c0_0] : memref<8x128xf32, #tpu.memory_space<vmem>>, vector<8x128xf32>
    %c0_1 = arith.constant 0 : index
    %c0_2 = arith.constant 0 : index
    %1 = vector.load %arg2[%c0_1, %c0_2] : memref<1x128xi32, #tpu.memory_space<vmem>>, vector<1x128xi32>
    %c0_3 = arith.constant 0 : index
    %c0_4 = arith.constant 0 : index
    %2 = vector.load %arg3[%c0_3, %c0_4] : memref<8x1xf32, #tpu.memory_space<vmem>>, vector<8x1xf32>
    %c128_i32 = arith.constant 128 : i32
    %3 = arith.muli %arg0, %c128_i32 : i32
    %4 = tpu.iota {dimensions = array<i32: 1>} : vector<1x128xi32>
    %5 = vector.broadcast %3 : i32 to vector<1x128xi32>
    %6 = arith.addi %5, %4 : vector<1x128xi32>
    %c64_i32 = arith.constant 64 : i32
    %7 = vector.broadcast %c64_i32 : i32 to vector<1x128xi32>
    %8 = arith.cmpi slt, %6, %7 : vector<1x128xi32>
    %cst = arith.constant dense<0xFF800000> : vector<128xf32>
    %9 = vector.multi_reduction <maximumf>, %0, %cst [0] : vector<8x128xf32> to vector<128xf32>
    %10 = vector.shape_cast %9 : vector<128xf32> to vector<1x128xf32>
    %11 = vector.broadcast %10 : vector<1x128xf32> to vector<8x128xf32>
    %12 = arith.subf %0, %11 : vector<8x128xf32>
    %13 = math.exp %12 : vector<8x128xf32>
    %cst_5 = arith.constant dense<0.000000e+00> : vector<128xf32>
    %14 = vector.multi_reduction <add>, %13, %cst_5 [0] : vector<8x128xf32> to vector<128xf32>
    %15 = vector.shape_cast %14 : vector<128xf32> to vector<1x128xf32>
    %16 = tpu.iota {dimensions = array<i32: 0>} : vector<8x128xi32>
    %17 = vector.broadcast %1 : vector<1x128xi32> to vector<8x128xi32>
    %18 = arith.cmpi eq, %16, %17 : vector<8x128xi32>
    %cst_6 = arith.constant 0.000000e+00 : f32
    %19 = vector.broadcast %cst_6 : f32 to vector<8x128xf32>
    %20 = arith.select %18, %12, %19 : vector<8x128xi1>, vector<8x128xf32>
    %cst_7 = arith.constant dense<0.000000e+00> : vector<128xf32>
    %21 = vector.multi_reduction <add>, %20, %cst_7 [0] : vector<8x128xf32> to vector<128xf32>
    %22 = vector.shape_cast %21 : vector<128xf32> to vector<1x128xf32>
    %cst_8 = arith.constant 0.000000e+00 : f32
    %23 = vector.broadcast %cst_8 : f32 to vector<8x128xf32>
    %24 = arith.select %18, %13, %23 : vector<8x128xi1>, vector<8x128xf32>
    %cst_9 = arith.constant dense<0.000000e+00> : vector<128xf32>
    %25 = vector.multi_reduction <add>, %24, %cst_9 [0] : vector<8x128xf32> to vector<128xf32>
    %26 = vector.shape_cast %25 : vector<128xf32> to vector<1x128xf32>
    %cst_10 = arith.constant 0.000000e+00 : f32
    %27 = vector.shape_cast %2 : vector<8x1xf32> to vector<8x1xf32>
    %28 = vector.broadcast %27 : vector<8x1xf32> to vector<8x128xf32>
    %29 = vector.broadcast %cst_10 : f32 to vector<8x128xf32>
    %30 = arith.select %18, %28, %29 : vector<8x128xi1>, vector<8x128xf32>
    %cst_11 = arith.constant dense<0.000000e+00> : vector<128xf32>
    %31 = vector.multi_reduction <add>, %30, %cst_11 [0] : vector<8x128xf32> to vector<128xf32>
    %32 = vector.shape_cast %31 : vector<128xf32> to vector<1x128xf32>
    %33 = math.log %15 : vector<1x128xf32>
    %34 = arith.subf %22, %33 : vector<1x128xf32>
    %35 = tpu.reciprocal %15 : vector<1x128xf32> -> vector<1x128xf32>
    %36 = arith.mulf %26, %35 : vector<1x128xf32>
    %cst_12 = arith.constant 0.000000e+00 : f32
    %37 = vector.broadcast %cst_12 : f32 to vector<1x128xf32>
    %38 = arith.subf %37, %34 : vector<1x128xf32>
    %cst_13 = arith.constant 1.000000e+00 : f32
    %39 = vector.broadcast %cst_13 : f32 to vector<1x128xf32>
    %40 = arith.subf %39, %36 : vector<1x128xf32>
    %cst_14 = arith.constant 0.000000e+00 : f32
    %41 = vector.broadcast %cst_14 : f32 to vector<1x128xf32>
    %42 = arith.maximumf %40, %41 : vector<1x128xf32>
    %43 = arith.mulf %42, %42 : vector<1x128xf32>
    %44 = arith.mulf %32, %43 : vector<1x128xf32>
    %45 = arith.mulf %44, %38 : vector<1x128xf32>
    %cst_15 = arith.constant 0.000000e+00 : f32
    %46 = vector.broadcast %cst_15 : f32 to vector<1x128xf32>
    %47 = arith.select %8, %45, %46 : vector<1x128xi1>, vector<1x128xf32>
    %48 = tpu.iota {dimensions = array<i32: 1>} : vector<1x128xi32>
    %c0_i32 = arith.constant 0 : i32
    %49 = vector.broadcast %c0_i32 : i32 to vector<1x128xi32>
    %50 = arith.cmpi eq, %48, %49 : vector<1x128xi32>
    %51 = vector.shape_cast %47 : vector<1x128xf32> to vector<1x1x128xf32>
    %cst_16 = arith.constant dense<0.000000e+00> : vector<1xf32>
    %52 = vector.multi_reduction <add>, %51, %cst_16 [1, 2] : vector<1x1x128xf32> to vector<1xf32>
    %53 = vector.shape_cast %52 : vector<1xf32> to vector<1x1x1xf32>
    %54 = vector.extract %53[0, 0, 0] : f32 from vector<1x1x1xf32>
    %cst_17 = arith.constant 0.000000e+00 : f32
    %55 = vector.broadcast %54 : f32 to vector<1x128xf32>
    %56 = vector.broadcast %cst_17 : f32 to vector<1x128xf32>
    %57 = arith.select %50, %55, %56 : vector<1x128xi1>, vector<1x128xf32>
    %c0_18 = arith.constant 0 : index
    %c0_19 = arith.constant 0 : index
    %58 = vector.load %arg4[%c0_18, %c0_19] : memref<1x128xf32, #tpu.memory_space<vmem>>, vector<1x128xf32>
    tpu.vector_store %arg4[%c0_18, %c0_19], %57 {strides = array<i32>} : memref<1x128xf32, #tpu.memory_space<vmem>>, vector<1x128xf32>,
    return
  }
  func.func @transform_0(%arg0: i32) -> (i32, i32) {
    %c0_i32 = arith.constant 0 : i32
    %c0_i32_0 = arith.constant 0 : i32
    return %c0_i32, %arg0 : i32, i32
  }
  func.func @transform_1(%arg0: i32) -> (i32, i32) {
    %c0_i32 = arith.constant 0 : i32
    %c0_i32_0 = arith.constant 0 : i32
    return %c0_i32, %arg0 : i32, i32
  }
  func.func @transform_2(%arg0: i32) -> (i32, i32) {
    %c0_i32 = arith.constant 0 : i32
    %c0_i32_0 = arith.constant 0 : i32
    %c0_i32_1 = arith.constant 0 : i32
    return %c0_i32, %c0_i32_0 : i32, i32
  }
  func.func @transform_3(%arg0: i32) -> (i32, i32) {
    %c0_i32 = arith.constant 0 : i32
    %c0_i32_0 = arith.constant 0 : i32
    return %c0_i32, %arg0 : i32, i32
  }
}

</mosaic_0001>

<llo_original>
// kernel: tpu_custom_call.1
$region0: #{tpu_custom_call.1}
  #allocation0 [shape = 'u32[]', space=smem, size = 0x4, offset = 0x4, fixed_abs, tag = 'smem constant byte address 0x4 - core index']
  #allocation1 [shape = 'u32[144,128]{1,0:T(1,128)}', space=vmem, size = 0x12000, scoped, tag = 'internal scratch']
  %s0 = inlined_call_operand.vmem [shape: f32[8,128], index: 0, kind: input, shape index: {}]
  %s1 = inlined_call_operand.vmem [shape: s32[1,128], index: 1, kind: input, shape index: {}]
  %s2 = inlined_call_operand.vmem [shape: f32[8,1], index: 2, kind: input, shape index: {}]
  %s3 = inlined_call_operand.hbm [shape: f32[1,128], index: 3, kind: output, shape index: {}]
  %s4 = sld [smem:[#allocation0]]
  $region22: #{tpu_custom_call.1} parent=0
    _
  %s6 = ssub.s32 1, %s4
  %s7 = scalar_select 0, %s6, %s4
  $region1: #{tpu_custom_call.1} parent=0
    #allocation2 [shape = 'u8[512]{0}', space=vmem, size = 0x400, scoped, tag = 'output window, operand 0, single buffered']
    #allocation3 [shape = 's32[1]{0}', space=sflag, size = 0x4, scoped, tag = 'scoped memory for tpu_custom_call.1']
    %8 = vsyncpa [#allocation3], 0
    // Predicated region
    $region2: #{tpu_custom_call.1} parent=1 // pred_check
      _
    $region3: #{tpu_custom_call.1} parent=1 // pred_check_branch
      %10 = sbr.rel (0) target = $region5
    $region4: #{tpu_custom_call.1} parent=1 // pred_region
      _
    $region5: #{tpu_custom_call.1} parent=1 // pred_fallthru
      _
    // Predicated region
    $region6: #{tpu_custom_call.1} parent=1 // pred_check
      _
    $region7: #{tpu_custom_call.1} parent=1 // pred_check_branch
      %12 = sbr.rel (0) target = $region9
    $region8: #{tpu_custom_call.1} parent=1 // pred_region
      _
    $region9: #{tpu_custom_call.1} parent=1 // pred_fallthru
      _
    // Predicated region
    $region10: #{tpu_custom_call.1} parent=1 // pred_check
      _
    $region11: #{tpu_custom_call.1} parent=1 // pred_check_branch
      %14 = sbr.rel (0) target = $region13
    $region12: #{tpu_custom_call.1} parent=1 // pred_region
      _
    $region13: #{tpu_custom_call.1} parent=1 // pred_fallthru
      _
    %v15 = vld [vmem:[%s0] sm:$0xff]
    %v16 = vld [vmem:[%s1] sm:$0x1]
    %v17 = vld [vmem:[%s2] sm:$0xff]
    %s18 = smul.u32 0, 128
    %v19 = vlaneseq
    %v20 = vand.u32 %v19, 127
    %v21 = vstv %s18
    %v22 = vadd.s32 %v21, %v20
    %vm23 = vcmp.lt.s32.totalorder %v22, 64
    %v24 = vrot.slane %v15, 4
    %v25 = vmax.f32 %v15, %v24
    %v26 = vrot.slane %v25, 2
    %v27 = vmax.f32 %v25, %v26
    %v28 = vrot.slane %v27, 1
    %v29 = vmax.f32 %v27, %v28
    %v30 = vsub.f32 %v15, %v29
    %v31 = vmul.f32 %v30, 1.442695
    %v32 = vpow.pop %v31
    %v33 = vrot.slane %v32, 4
    %v34 = vadd.f32 %v32, %v33
    %v35 = vrot.slane %v34, 2
    %v36 = vadd.f32 %v34, %v35
    %v37 = vrot.slane %v36, 1
    %v38 = vadd.f32 %v36, %v37
    %v39 = vlaneseq
    %v40 = vshrl.u32 %v39, 7
    %v41 = vlaneseq
    %v42 = vshrl.u32 %v41, 7
    %v43 = vsub.s32 0, %v42
    %v44 = vrot.slane %v16, %v43
    %vm45 = vcmp.eq.s32.totalorder %v40, %v44
    %v46 = vsel %vm45, %v30, 0.0
    %v47 = vrot.slane %v46, 4
    %v48 = vadd.f32 %v46, %v47
    %v49 = vrot.slane %v48, 2
    %v50 = vadd.f32 %v48, %v49
    %v51 = vrot.slane %v50, 1
    %v52 = vadd.f32 %v50, %v51
    %v53 = vsel %vm45, %v32, 0.0
    %v54 = vrot.slane %v53, 4
    %v55 = vadd.f32 %v53, %v54
    %v56 = vrot.slane %v55, 2
    %v57 = vadd.f32 %v55, %v56
    %v58 = vrot.slane %v57, 1
    %v59 = vadd.f32 %v57, %v58
    %61 = vset.pattern.permute.xlu0 0
    %62 = vperm.xlu0 %61, %v17
    %v63 = vpop.permute.xlu0 %62
    %v65 = vsel %vm45, %v63, 0.0
    %v66 = vrot.slane %v65, 4
    %v67 = vadd.f32 %v65, %v66
    %v68 = vrot.slane %v67, 2
    %v69 = vadd.f32 %v67, %v68
    %v70 = vrot.slane %v69, 1
    %v71 = vadd.f32 %v69, %v70
    %v72 = vlog2.pop %v38
    %v73 = vmul.f32 %v72, 0.6931472
    %v74 = vsub.f32 %v52, %v73
    %v75 = vrcp.pop %v38
    %v76 = vmul.f32 %v59, %v75
    %v77 = vsub.f32 0.0, %v74
    %v78 = vsub.f32 1.0, %v76
    %v79 = vmax.f32 %v78, 0.0
    %v80 = vmul.f32 %v79, %v79
    %v81 = vmul.f32 %v71, %v80
    %v82 = vmul.f32 %v81, %v77
    %v83 = vsel %vm23, %v82, 0.0
    %vm84 = vcmp.eq.s32.totalorder %v20, 0
    %vm85 = vcmask 1040384
    %v86 = vsel %vm85, %v83, 0.0
    %87 = vadd.xlane.f32.xlu0 %v86
    %v88 = vpop.xlane.xlu0 %87
    %v89 = vrot.slane %v88, 4
    %v90 = vadd.f32 %v88, %v89
    %v91 = vrot.slane %v90, 2
    %v92 = vadd.f32 %v90, %v91
    %v93 = vrot.slane %v92, 1
    %v94 = vadd.f32 %v92, %v93
    %s95 = vtos %v94
    %v96 = vstv %s95
    %v97 = vsel %vm84, %v96, 0.0
    %98 = vst [vmem:[#allocation2] sm:$0x1] %v97
    // Predicated region
    $region14: #{tpu_custom_call.1} parent=1 // pred_check
      _
    $region15: #{tpu_custom_call.1} parent=1 // pred_check_branch
      %100 = sbr.rel (0) target = $region17
    $region16: #{tpu_custom_call.1} parent=1 // pred_region
      %s102 = ssub.s32 16, 16
      %103 = vsyncadd [#allocation3], %s102
      %s105 = sshll.u32 [#allocation2], 4
      %s106 = int_to_ptr.vmem [resolvable:$true] %s105
      %108 = dma.vmem_to_hbm [thread:$0]  %s106, 16, %s3, [#allocation3]
    $region17: #{tpu_custom_call.1} parent=1 // pred_fallthru
      _
    // Predicated region
    $region18: #{tpu_custom_call.1} parent=1 // pred_check
      _
    $region19: #{tpu_custom_call.1} parent=1 // pred_check_branch
      %110 = sbr.rel (0) target = $region21
    $region20: #{tpu_custom_call.1} parent=1 // pred_region
      %111 = dma.done [#allocation3], 16
    $region21: #{tpu_custom_call.1} parent=1 // pred_fallthru
      _
    %112 = vsyncpa [#allocation3], 1

</llo_original>
